<compile_context>
chip_gen: v5e
topology: v5e:2x2
jax: 0.10.0
libtpu: 0.0.40
codegen_flags: <defaults>
</compile_context>

<pallas_src>
import functools

import jax
import jax.numpy as jnp
from jax import lax
from jax.experimental import pallas as pl
from jax.experimental.pallas import tpu as pltpu

_HALO = 8  # halo block height (sublane multiple); supports kernels up to 9 rows


def _conv_stats_kernel(xm_ref, xh_ref, w_ref, y_ref, s_ref, *, KH, KW, H):
    """Pass 1: conv(same/reflect) via im2col bf16 matmul + BN partial sums.

    xm_ref: (1, TH, Wp, Cin)    bf16  main padded-input rows of this row block
    xh_ref: (1, _HALO, Wp, Cin) bf16  following rows (halo); only first KH-1 used
    w_ref : (KH*KW*Cin, Cout)   bf16  folded conv weight
    y_ref : (1, TH, W, Cout)    f32   conv output tile
    s_ref : (1, 1, 2, Cout)     f32   per-tile [sum, sum_of_squares] over rows
    """
    _, TH, Wp, Cin = xm_ref.shape
    _, _, W, Cout = y_ref.shape

    # Rows needed by this row block: TH + KH - 1 (main rows + halo rows).
    xin = jnp.concatenate([xm_ref[0], xh_ref[0, :KH - 1]], axis=0)  # (TH+KH-1, Wp, Cin)

    # im2col: one deep MXU contraction (K = KH*KW*Cin) instead of KH*KW shallow dots.
    taps = []
    for dy in range(KH):
        for dx in range(KW):
            taps.append(xin[dy:dy + TH, dx:dx + W, :].reshape(TH * W, Cin))
    col = jnp.concatenate(taps, axis=-1)                            # (TH*W, KH*KW*Cin) bf16

    acc = jnp.dot(col, w_ref[...], preferred_element_type=jnp.float32)  # (TH*W, Cout) f32
    y_ref[...] = acc.reshape(1, TH, W, Cout)

    # One-sweep BN partial statistics; mask rows past H if the last row block is ragged.
    if H % TH != 0:
        i = pl.program_id(1)
        r = lax.broadcasted_iota(jnp.int32, (TH * W, 1), 0) // W
        acc_s = jnp.where((i * TH + r) < H, acc, 0.0)
    else:
        acc_s = acc
    s1 = jnp.sum(acc_s, axis=0, keepdims=True)                      # (1, Cout)
    s2 = jnp.sum(acc_s * acc_s, axis=0, keepdims=True)              # (1, Cout)
    s_ref[...] = jnp.concatenate([s1, s2], axis=0).reshape(1, 1, 2, Cout)


def _bn_prelu_kernel(y_ref, scale_ref, shift_ref, alpha_ref, o_ref):
    """Pass 2: lane-dense (rows, W*Cout) normalize + PReLU, all f32 on the VPU."""
    z = y_ref[...] * scale_ref[...] + shift_ref[...]
    o_ref[...] = jnp.where(z > 0, z, alpha_ref[...] * z)


def upconv2d_forward(x_nchw, weight, gamma, beta, alpha, eps=1e-5, row_block=None):
    """Forward pass of UpConv2D.  x_nchw: (N, Cin, H, W) f32.  Returns (N, Cout, H, W) f32."""
    N, Cin, H, W = x_nchw.shape
    KH, KW, _, Cout = weight.shape
    assert KH - 1 <= _HALO, "row halo supports kernels up to 9 rows"

    # PyTorch padding='same' (reflect): left = (k-1)//2, right = (k-1) - left.
    pt, pb = (KH - 1) // 2, (KH - 1) - (KH - 1) // 2
    pw, pr = (KW - 1) // 2, (KW - 1) - (KW - 1) // 2
    Wp = W + KW - 1

    # Row-block size: multiple of 8 sublanes, bounded by a conservative VMEM budget so the
    # double-buffered pipeline also fits v7x's 64 MiB VMEM.
    if row_block is None:
        per_row = Wp * Cin * 2 + W * Cout * 4 + W * KH * KW * Cin * 2 + W * Cout * 4
        cand = min(512, (2 * 1024 * 1024) // max(per_row, 1), (H + 7) // 8 * 8)
        row_block = max(8, (cand // 8) * 8)
    TH = int(row_block)
    assert TH % 8 == 0, "row_block must be a multiple of 8"
    RB = pl.cdiv(H, TH)
    hb = TH // _HALO  # halo block index stride

    # --- glue: NCHW -> NHWC, reflect pad, halo zero-pad, bf16 cast ---------------------
    # TODO(synk): keep NHWC end-to-end in the surrounding model so this input transpose and
    # the output transpose below (pure HBM copies) disappear.
    xb = jnp.transpose(x_nchw.astype(jnp.bfloat16), (0, 2, 3, 1))            # (N, H, W, Cin)
    xp = jnp.pad(xb, ((0, 0), (pt, pb), (pw, pr), (0, 0)), mode="reflect")
    extra = RB * TH + _HALO - (H + KH - 1)
    xp = jnp.pad(xp, ((0, 0), (0, extra), (0, 0), (0, 0)))                   # halo slack rows
    w_fold = weight.astype(jnp.bfloat16).reshape(KH * KW * Cin, Cout)

    # --- pass 1: tiled conv + BN partial sums ------------------------------------------
    conv_out, stats = pl.pallas_call(
        functools.partial(_conv_stats_kernel, KH=KH, KW=KW, H=H),
        grid=(N, RB),
        in_specs=[
            pl.BlockSpec((1, TH, Wp, Cin), lambda n, i: (n, i, 0, 0)),
            pl.BlockSpec((1, _HALO, Wp, Cin), lambda n, i: (n, (i + 1) * hb, 0, 0)),
            pl.BlockSpec((KH * KW * Cin, Cout), lambda n, i: (0, 0)),
        ],
        out_specs=[
            pl.BlockSpec((1, TH, W, Cout), lambda n, i: (n, i, 0, 0)),
            pl.BlockSpec((1, 1, 2, Cout), lambda n, i: (n, i, 0, 0)),
        ],
        out_shape=[
            jax.ShapeDtypeStruct((N, H, W, Cout), jnp.float32),
            jax.ShapeDtypeStruct((N, RB, 2, Cout), jnp.float32),
        ],
        compiler_params=pltpu.CompilerParams(
            dimension_semantics=("parallel", "parallel"),
            vmem_limit_bytes=32 * 1024 * 1024),
    )(xp, xp, w_fold)

    # --- tiny per-channel BN/PReLU parameter math (XLA glue) ---------------------------
    M = N * H * W
    s = jnp.sum(stats, axis=(0, 1))                              # (2, Cout)
    mean = s[0] / M
    var = jnp.maximum(s[1] / M - mean * mean, 0.0)               # biased (training-mode) var
    scale = gamma.astype(jnp.float32) * lax.rsqrt(var + eps)
    shift = beta.astype(jnp.float32) - mean * scale
    L = W * Cout
    scale_t = jnp.tile(scale, W).reshape(1, L)
    shift_t = jnp.tile(shift, W).reshape(1, L)
    alpha_t = jnp.tile(alpha.astype(jnp.float32), W).reshape(1, L)

    # --- pass 2: lane-dense normalize + PReLU ------------------------------------------
    NH = N * H
    y2 = conv_out.reshape(NH, L)                                 # free row-major reshape
    TR = min(NH, max(8, ((2 * 1024 * 1024) // (L * 4) // 8) * 8))
    out2 = pl.pallas_call(
        _bn_prelu_kernel,
        grid=(pl.cdiv(NH, TR),),
        in_specs=[
            pl.BlockSpec((TR, L), lambda i: (i, 0)),
            pl.BlockSpec((1, L), lambda i: (0, 0)),
            pl.BlockSpec((1, L), lambda i: (0, 0)),
            pl.BlockSpec((1, L), lambda i: (0, 0)),
        ],
        out_specs=pl.BlockSpec((TR, L), lambda i: (i, 0)),
        out_shape=jax.ShapeDtypeStruct((NH, L), jnp.float32),
        compiler_params=pltpu.CompilerParams(
            dimension_semantics=("parallel",),
            vmem_limit_bytes=32 * 1024 * 1024),
    )(y2, scale_t, shift_t, alpha_t)

    return jnp.transpose(out2.reshape(N, H, W, Cout), (0, 3, 1, 2))


def _reference_forward(x_nchw, weight_khki_o, gamma, beta, alpha, eps=1e-5):
    """Pure-JAX reference mirroring the PyTorch module (f32)."""
    KH, KW, Cin, Cout = weight_khki_o.shape
    pt, pb = (KH - 1) // 2, (KH - 1) - (KH - 1) // 2
    pw, pr = (KW - 1) // 2, (KW - 1) - (KW - 1) // 2
    xp = jnp.pad(x_nchw, ((0, 0), (0, 0), (pt, pb), (pw, pr)), mode="reflect")
    w_oihw = jnp.transpose(weight_khki_o, (3, 2, 0, 1))
    y = lax.conv_general_dilated(
        xp, w_oihw, window_strides=(1, 1), padding="VALID",
        dimension_numbers=("NCHW", "OIHW", "NCHW"))
    mean = jnp.mean(y, axis=(0, 2, 3), keepdims=True)
    var = jnp.mean((y - mean) ** 2, axis=(0, 2, 3), keepdims=True)
    y = (y - mean) * lax.rsqrt(var + eps)
    y = y * gamma[None, :, None, None] + beta[None, :, None, None]
    a = alpha[None, :, None, None]
    return jnp.where(y > 0, y, a * y)


if __name__ == "__main__":
    # Small deterministic problem: N=2, Cin=4, Cout=8, H=W=16, kernel=3.
    N, Cin, Cout, H, W, K = 2, 4, 8, 16, 16, 3

    key = jax.random.PRNGKey(0)
    kx, kw = jax.random.split(key)
    x = jax.random.normal(kx, (N, Cin, H, W), dtype=jnp.float32)
    weight = 0.1 * jax.random.normal(kw, (K, K, Cin, Cout), dtype=jnp.float32)
    # BatchNorm2d default init: weight=1, bias=0.  PReLU default init: 0.25 per channel.
    gamma = jnp.ones((Cout,), jnp.float32)
    beta = jnp.zeros((Cout,), jnp.float32)
    alpha = jnp.full((Cout,), 0.25, jnp.float32)

    # row_block=8 -> 2 row blocks per image, exercising the halo/tiling path.
    out = jax.block_until_ready(
        upconv2d_forward(x, weight, gamma, beta, alpha, row_block=8))
    assert out.shape == (N, Cout, H, W)

    # The Pallas conv runs in bf16 (per perf guidance), so compare against the f32
    # reference evaluated on bf16-rounded inputs (accumulation stays f32 in both).
    xb = x.astype(jnp.bfloat16).astype(jnp.float32)
    wb = weight.astype(jnp.bfloat16).astype(jnp.float32)
    ref = jax.block_until_ready(_reference_forward(xb, wb, gamma, beta, alpha))

    err = float(jnp.max(jnp.abs(out - ref)))
    assert err < 1e-2, err
    print("KERNEL_OK")
</pallas_src>

<mosaic_0001>
module attributes {stable_mosaic.version = 11 : i64} {
  func.func @_conv_stats_kernel(%arg0: i32, %arg1: i32, %arg2: memref<1x8x18x4xbf16, #tpu.memory_space<vmem>>, %arg3: memref<1x8x18x4xbf16, #tpu.memory_space<vmem>>, %arg4: memref<36x8xbf16, #tpu.memory_space<vmem>>, %arg5: memref<1x8x16x8xf32, #tpu.memory_space<vmem>>, %arg6: memref<1x1x2x8xf32, #tpu.memory_space<vmem>>) attributes {dimension_semantics = [#tpu.dimension_semantics<parallel>, #tpu.dimension_semantics<parallel>], iteration_bounds = array<i64: 2, 2>, scalar_prefetch = 0 : i64, scratch_operands = 0 : i64, tpu.core_type = #tpu.core_type<tc>, window_params = [{transform_indices = @transform_0, window_bounds = array<i64: 1, 8, 18, 4>}, {transform_indices = @transform_1, window_bounds = array<i64: 1, 8, 18, 4>}, {pipeline_mode = #tpu.pipeline_mode<synchronous>, transform_indices = @transform_2, window_bounds = array<i64: 36, 8>}, {transform_indices = @transform_3, window_bounds = array<i64: 1, 8, 16, 8>}, {transform_indices = @transform_4, window_bounds = array<i64: 1, 1, 2, 8>}]} {
    %c0 = arith.constant 0 : index
    %c0_0 = arith.constant 0 : index
    %c0_1 = arith.constant 0 : index
    %c0_2 = arith.constant 0 : index
    %0 = vector.load %arg2[%c0, %c0_0, %c0_1, %c0_2] : memref<1x8x18x4xbf16, #tpu.memory_space<vmem>>, vector<1x8x18x4xbf16>
    %1 = vector.shape_cast %0 : vector<1x8x18x4xbf16> to vector<8x18x4xbf16>
    %c0_3 = arith.constant 0 : index
    %c0_4 = arith.constant 0 : index
    %c0_5 = arith.constant 0 : index
    %c0_6 = arith.constant 0 : index
    %2 = vector.load %arg3[%c0_3, %c0_4, %c0_5, %c0_6] : memref<1x8x18x4xbf16, #tpu.memory_space<vmem>>, vector<1x2x18x4xbf16>
    %3 = vector.shape_cast %2 : vector<1x2x18x4xbf16> to vector<2x18x4xbf16>
    %4 = tpu.concatenate %1, %3 in 0 : vector<8x18x4xbf16>, vector<2x18x4xbf16> -> vector<10x18x4xbf16>
    %5 = vector.extract_strided_slice %4 {offsets = [0, 0, 0], sizes = [8, 16, 4], strides = [1, 1, 1]} : vector<10x18x4xbf16> to vector<8x16x4xbf16>
    %6 = vector.shape_cast %5 : vector<8x16x4xbf16> to vector<128x4xbf16>
    %7 = vector.extract_strided_slice %4 {offsets = [0, 1, 0], sizes = [8, 16, 4], strides = [1, 1, 1]} : vector<10x18x4xbf16> to vector<8x16x4xbf16>
    %8 = vector.shape_cast %7 : vector<8x16x4xbf16> to vector<128x4xbf16>
    %9 = vector.extract_strided_slice %4 {offsets = [0, 2, 0], sizes = [8, 16, 4], strides = [1, 1, 1]} : vector<10x18x4xbf16> to vector<8x16x4xbf16>
    %10 = vector.shape_cast %9 : vector<8x16x4xbf16> to vector<128x4xbf16>
    %11 = vector.extract_strided_slice %4 {offsets = [1, 0, 0], sizes = [8, 16, 4], strides = [1, 1, 1]} : vector<10x18x4xbf16> to vector<8x16x4xbf16>
    %12 = vector.shape_cast %11 : vector<8x16x4xbf16> to vector<128x4xbf16>
    %13 = vector.extract_strided_slice %4 {offsets = [1, 1, 0], sizes = [8, 16, 4], strides = [1, 1, 1]} : vector<10x18x4xbf16> to vector<8x16x4xbf16>
    %14 = vector.shape_cast %13 : vector<8x16x4xbf16> to vector<128x4xbf16>
    %15 = vector.extract_strided_slice %4 {offsets = [1, 2, 0], sizes = [8, 16, 4], strides = [1, 1, 1]} : vector<10x18x4xbf16> to vector<8x16x4xbf16>
    %16 = vector.shape_cast %15 : vector<8x16x4xbf16> to vector<128x4xbf16>
    %17 = vector.extract_strided_slice %4 {offsets = [2, 0, 0], sizes = [8, 16, 4], strides = [1, 1, 1]} : vector<10x18x4xbf16> to vector<8x16x4xbf16>
    %18 = vector.shape_cast %17 : vector<8x16x4xbf16> to vector<128x4xbf16>
    %19 = vector.extract_strided_slice %4 {offsets = [2, 1, 0], sizes = [8, 16, 4], strides = [1, 1, 1]} : vector<10x18x4xbf16> to vector<8x16x4xbf16>
    %20 = vector.shape_cast %19 : vector<8x16x4xbf16> to vector<128x4xbf16>
    %21 = vector.extract_strided_slice %4 {offsets = [2, 2, 0], sizes = [8, 16, 4], strides = [1, 1, 1]} : vector<10x18x4xbf16> to vector<8x16x4xbf16>
    %22 = vector.shape_cast %21 : vector<8x16x4xbf16> to vector<128x4xbf16>
    %23 = tpu.concatenate %6, %8, %10, %12, %14, %16, %18, %20, %22 in 1 : vector<128x4xbf16>, vector<128x4xbf16>, vector<128x4xbf16>, vector<128x4xbf16>, vector<128x4xbf16>, vector<128x4xbf16>, vector<128x4xbf16>, vector<128x4xbf16>, vector<128x4xbf16> -> vector<128x36xbf16>
    %c0_7 = arith.constant 0 : index
    %c0_8 = arith.constant 0 : index
    %24 = vector.load %arg4[%c0_7, %c0_8] : memref<36x8xbf16, #tpu.memory_space<vmem>>, vector<36x8xbf16>
    %cst = arith.constant dense<0.000000e+00> : vector<128x8xf32>
    %25 = tpu.matmul %23, %24, %cst {dimension_numbers = #tpu.dot_dimension_numbers<[1], [0], [0], [1], [0, 0, 1, 1], [], []>} : vector<128x36xbf16>, vector<36x8xbf16>, vector<128x8xf32> -> vector<128x8xf32>
    %26 = vector.shape_cast %25 : vector<128x8xf32> to vector<1x8x16x8xf32>
    %c0_9 = arith.constant 0 : index
    %c0_10 = arith.constant 0 : index
    %c0_11 = arith.constant 0 : index
    %c0_12 = arith.constant 0 : index
    %27 = vector.load %arg5[%c0_9, %c0_10, %c0_11, %c0_12] : memref<1x8x16x8xf32, #tpu.memory_space<vmem>>, vector<1x8x16x8xf32>
    tpu.vector_store %arg5[%c0_9, %c0_10, %c0_11, %c0_12], %26 {strides = array<i32>} : memref<1x8x16x8xf32, #tpu.memory_space<vmem>>, vector<1x8x16x8xf32>,
    %cst_13 = arith.constant dense<0.000000e+00> : vector<8xf32>
    %28 = vector.multi_reduction <add>, %25, %cst_13 [0] : vector<128x8xf32> to vector<8xf32>
    %29 = vector.shape_cast %28 : vector<8xf32> to vector<1x8xf32>
    %30 = arith.mulf %25, %25 : vector<128x8xf32>
    %cst_14 = arith.constant dense<0.000000e+00> : vector<8xf32>
    %31 = vector.multi_reduction <add>, %30, %cst_14 [0] : vector<128x8xf32> to vector<8xf32>
    %32 = vector.shape_cast %31 : vector<8xf32> to vector<1x8xf32>
    %33 = tpu.concatenate %29, %32 in 0 : vector<1x8xf32>, vector<1x8xf32> -> vector<2x8xf32>
    %34 = vector.shape_cast %33 : vector<2x8xf32> to vector<1x1x2x8xf32>
    %c0_15 = arith.constant 0 : index
    %c0_16 = arith.constant 0 : index
    %c0_17 = arith.constant 0 : index
    %c0_18 = arith.constant 0 : index
    %35 = vector.load %arg6[%c0_15, %c0_16, %c0_17, %c0_18] : memref<1x1x2x8xf32, #tpu.memory_space<vmem>>, vector<1x1x2x8xf32>
    tpu.vector_store %arg6[%c0_15, %c0_16, %c0_17, %c0_18], %34 {strides = array<i32>} : memref<1x1x2x8xf32, #tpu.memory_space<vmem>>, vector<1x1x2x8xf32>,
    return
  }
  func.func @transform_0(%arg0: i32, %arg1: i32) -> (i32, i32, i32, i32) {
    %c0_i32 = arith.constant 0 : i32
    %c0_i32_0 = arith.constant 0 : i32
    %c0_i32_1 = arith.constant 0 : i32
    return %arg0, %arg1, %c0_i32, %c0_i32_0 : i32, i32, i32, i32
  }
  func.func @transform_1(%arg0: i32, %arg1: i32) -> (i32, i32, i32, i32) {
    %c1_i32 = arith.constant 1 : i32
    %0 = arith.addi %arg1, %c1_i32 : i32
    %c1_i32_0 = arith.constant 1 : i32
    %1 = arith.muli %0, %c1_i32_0 : i32
    %c0_i32 = arith.constant 0 : i32
    %c0_i32_1 = arith.constant 0 : i32
    %c0_i32_2 = arith.constant 0 : i32
    return %arg0, %1, %c0_i32, %c0_i32_1 : i32, i32, i32, i32
  }
  func.func @transform_2(%arg0: i32, %arg1: i32) -> (i32, i32) {
    %c0_i32 = arith.constant 0 : i32
    %c0_i32_0 = arith.constant 0 : i32
    %c0_i32_1 = arith.constant 0 : i32
    return %c0_i32, %c0_i32_0 : i32, i32
  }
  func.func @transform_3(%arg0: i32, %arg1: i32) -> (i32, i32, i32, i32) {
    %c0_i32 = arith.constant 0 : i32
    %c0_i32_0 = arith.constant 0 : i32
    %c0_i32_1 = arith.constant 0 : i32
    return %arg0, %arg1, %c0_i32, %c0_i32_0 : i32, i32, i32, i32
  }
  func.func @transform_4(%arg0: i32, %arg1: i32) -> (i32, i32, i32, i32) {
    %c0_i32 = arith.constant 0 : i32
    %c0_i32_0 = arith.constant 0 : i32
    %c0_i32_1 = arith.constant 0 : i32
    return %arg0, %arg1, %c0_i32, %c0_i32_0 : i32, i32, i32, i32
  }
}

</mosaic_0001>

<llo_original>
// kernel: tpu_custom_call.1
$region0: #{tpu_custom_call.1}
  #allocation0 [shape = 'u32[]', space=smem, size = 0x4, offset = 0x4, fixed_abs, tag = 'smem constant byte address 0x4 - core index']
  #allocation1 [shape = 'u32[72,128]{1,0:T(1,128)}', space=vmem, size = 0x9000, scoped, tag = 'internal scratch']
  %s0 = inlined_call_operand.vmem [shape: bf16[2,24,18,4], index: 0, kind: input, shape index: {}]
  %s1 = inlined_call_operand.vmem [shape: bf16[2,24,18,4], index: 1, kind: input, shape index: {}]
  %s2 = inlined_call_operand.vmem [shape: bf16[36,8], index: 2, kind: input, shape index: {}]
  %s3 = inlined_call_operand.vmem [shape: f32[2,16,16,8], index: 3, kind: output, shape index: {0}]
  %s4 = inlined_call_operand.hbm [shape: f32[2,2,2,8], index: 4, kind: output, shape index: {1}]
  %5 = xla_tuple %s3, %s4
  %s6 = sld [smem:[#allocation0]]
  $region53: #{tpu_custom_call.1} parent=0
    _
  %s8 = ssub.s32 1, %s6
  %s9 = scalar_select 0, %s8, %s6
  $region1: #{tpu_custom_call.1} parent=0
    #allocation2 [shape = 'u8[2048]{0}', space=vmem, size = 0x800, scoped, tag = 'output window, operand 1']
    #allocation3 [shape = 's32[2]{0}', space=sflag, size = 0x8, scoped, tag = 'scoped memory for tpu_custom_call.1']
    %10 = vsyncpa [#allocation3], 0
    %s11 = scalar_lea.sflag [#allocation3], 1
    %12 = vsyncpa %s11, 0
    loop: start=0, step=1, limit=6
    $region2: #{tpu_custom_call.1} parent=1 // loop_pre_header
      _
    $region3: #{tpu_custom_call.1} parent=1 // loop_header
      %s14 = sphi 0, %s18
      %p15 = scmp.ge.s32.totalorder %s14, 6
      %s21 = sphi 0, %s33
      %s22 = sphi 0, %s29
      %s23 = sphi 0, %s21
      %s24 = sphi 0, %s22
      %s25 = sphi 0, %s23
      %s26 = sphi 0, %s24
      %s38 = sphi 0, %s40
      %s41 = sphi 0, %s38
      %s42 = sphi 0, %s41
      %s58 = sphi 0, %s42
      %s68 = sphi 0, %s70
      %s71 = sphi 0, %s68
      %s72 = sphi 0, %s71
      %s88 = sphi 0, %s72
      %s92 = sphi 0, %s92
      %s94 = sphi 0, %s92
      %s95 = sphi 0, %s94
      %s109 = sphi 0, %s95
      %s117 = sphi 0, %s119
      %s120 = sphi 0, %s117
      %s121 = sphi 0, %s120
      %s137 = sphi 0, %s121
      %s145 = sphi 0, %s147
      %s148 = sphi 0, %s145
      %s149 = sphi 0, %s148
      %s165 = sphi 0, %s149
    $region4: #{tpu_custom_call.1} parent=1 // loop_header_branch
      %17 = sbr.rel (%p15) target = $region8
    $region5: #{tpu_custom_call.1} parent=1 // loop_body
      %s19 = ssub.s32 %s14, 1
      %s20 = ssub.s32 %s14, 2
      %s27 = sadd.s32 1, %s22
      %p28 = scmp.ge.s32.totalorder %s27, 2
      %s29 = scalar_select %p28, 0, %s27
      %s30 = sadd.s32 1, %s21
      %s31 = scalar_select %p28, %s30, %s21
      %p32 = scmp.ge.s32.totalorder %s31, 2
      %s33 = scalar_select %p32, 0, %s31
      %s34 = ssub.s32 %s21, %s33
      %s35 = ssub.s32 %s22, %s29
      %s36 = sor.u32 %s34, %s35
      %p37 = scmp.eq.s32.totalorder %s36, 0
      %s39 = sadd.s32 %s38, 1
      %s40 = scalar_select %p37, %s38, %s39
      %p43 = pneg %p37
      %p44 = scmp.eq.s32.totalorder %s14, 3
      %p45 = por %p43, %p44
      %p46 = scmp.ne.s32.totalorder %s38, %s41
      %p47 = scmp.eq.s32.totalorder %s14, 0
      %p48 = por %p46, %p47
      %p49 = scmp.ne.s32.totalorder %s38, %s41
      %p50 = scmp.eq.s32.totalorder %s19, 3
      %p51 = por %p49, %p50
      %p52 = scmp.ne.s32.totalorder %s41, %s42
      %p53 = scmp.eq.s32.totalorder %s19, 0
      %p54 = por %p52, %p53
      %p55 = scmp.ne.s32.totalorder %s41, %s42
      %p56 = scmp.eq.s32.totalorder %s20, 3
      %p57 = por %p55, %p56
      %p59 = scmp.ne.s32.totalorder %s42, %s58
      %p60 = scmp.eq.s32.totalorder %s20, 0
      %p61 = por %p59, %p60
      %s62 = sadd.s32 %s22, 1
      %s63 = sadd.s32 %s29, 1
      %s64 = ssub.s32 %s21, %s33
      %s65 = ssub.s32 %s62, %s63
      %s66 = sor.u32 %s64, %s65
      %p67 = scmp.eq.s32.totalorder %s66, 0
      %s69 = sadd.s32 %s68, 1
      %s70 = scalar_select %p67, %s68, %s69
      %p73 = pneg %p67
      %p74 = scmp.eq.s32.totalorder %s14, 3
      %p75 = por %p73, %p74
      %p76 = scmp.ne.s32.totalorder %s68, %s71
      %p77 = scmp.eq.s32.totalorder %s14, 0
      %p78 = por %p76, %p77
      %p79 = scmp.ne.s32.totalorder %s68, %s71
      %p80 = scmp.eq.s32.totalorder %s19, 3
      %p81 = por %p79, %p80
      %p82 = scmp.ne.s32.totalorder %s71, %s72
      %p83 = scmp.eq.s32.totalorder %s19, 0
      %p84 = por %p82, %p83
      %p85 = scmp.ne.s32.totalorder %s71, %s72
      %p86 = scmp.eq.s32.totalorder %s20, 3
      %p87 = por %p85, %p86
      %p89 = scmp.ne.s32.totalorder %s72, %s88
      %p90 = scmp.eq.s32.totalorder %s20, 0
      %p91 = por %p89, %p90
      %s93 = sadd.s32 %s92, 1
      %p96 = scmp.eq.s32.totalorder %s14, 3
      %p97 = scmp.ne.s32.totalorder %s92, %s94
      %p98 = scmp.eq.s32.totalorder %s14, 0
      %p99 = por %p97, %p98
      %p100 = scmp.ne.s32.totalorder %s92, %s94
      %p101 = scmp.eq.s32.totalorder %s19, 3
      %p102 = por %p100, %p101
      %p103 = scmp.ne.s32.totalorder %s94, %s95
      %p104 = scmp.eq.s32.totalorder %s19, 0
      %p105 = por %p103, %p104
      %p106 = scmp.ne.s32.totalorder %s94, %s95
      %p107 = scmp.eq.s32.totalorder %s20, 3
      %p108 = por %p106, %p107
      %p110 = scmp.ne.s32.totalorder %s95, %s109
      %p111 = scmp.eq.s32.totalorder %s20, 0
      %p112 = por %p110, %p111
      %s113 = ssub.s32 %s21, %s33
      %s114 = ssub.s32 %s22, %s29
      %s115 = sor.u32 %s113, %s114
      %p116 = scmp.eq.s32.totalorder %s115, 0
      %s118 = sadd.s32 %s117, 1
      %s119 = scalar_select %p116, %s117, %s118
      %p122 = pneg %p116
      %p123 = scmp.eq.s32.totalorder %s14, 3
      %p124 = por %p122, %p123
      %p125 = scmp.ne.s32.totalorder %s117, %s120
      %p126 = scmp.eq.s32.totalorder %s14, 0
      %p127 = por %p125, %p126
      %p128 = scmp.ne.s32.totalorder %s117, %s120
      %p129 = scmp.eq.s32.totalorder %s19, 3
      %p130 = por %p128, %p129
      %p131 = scmp.ne.s32.totalorder %s120, %s121
      %p132 = scmp.eq.s32.totalorder %s19, 0
      %p133 = por %p131, %p132
      %p134 = scmp.ne.s32.totalorder %s120, %s121
      %p135 = scmp.eq.s32.totalorder %s20, 3
      %p136 = por %p134, %p135
      %p138 = scmp.ne.s32.totalorder %s121, %s137
      %p139 = scmp.eq.s32.totalorder %s20, 0
      %p140 = por %p138, %p139
      %s141 = ssub.s32 %s21, %s33
      %s142 = ssub.s32 %s22, %s29
      %s143 = sor.u32 %s141, %s142
      %p144 = scmp.eq.s32.totalorder %s143, 0
      %s146 = sadd.s32 %s145, 1
      %s147 = scalar_select %p144, %s145, %s146
      %p150 = pneg %p144
      %p151 = scmp.eq.s32.totalorder %s14, 3
      %p152 = por %p150, %p151
      %p153 = scmp.ne.s32.totalorder %s145, %s148
      %p154 = scmp.eq.s32.totalorder %s14, 0
      %p155 = por %p153, %p154
      %p156 = scmp.ne.s32.totalorder %s145, %s148
      %p157 = scmp.eq.s32.totalorder %s19, 3
      %p158 = por %p156, %p157
      %p159 = scmp.ne.s32.totalorder %s148, %s149
      %p160 = scmp.eq.s32.totalorder %s19, 0
      %p161 = por %p159, %p160
      %p162 = scmp.ne.s32.totalorder %s148, %s149
      %p163 = scmp.eq.s32.totalorder %s20, 3
      %p164 = por %p162, %p163
      %p166 = scmp.ne.s32.totalorder %s149, %s165
      %p167 = scmp.eq.s32.totalorder %s20, 0
      %p168 = por %p166, %p167
      %p169 = scmp.le.s32.totalorder 1, %s14
      %p170 = scmp.lt.s32.totalorder %s14, 5
      %p171 = pnand %p169, %p170
      %p172 = pneg %p171
      // Predicated region
      $region9: #{tpu_custom_call.1} parent=5 // pred_check
        _
      $region10: #{tpu_custom_call.1} parent=5 // pred_check_branch
        %174 = sbr.rel (%p171) target = $region12
      $region11: #{tpu_custom_call.1} parent=5 // pred_region
        %s175 = ssub.s32 %s14, 1
        // Predicated region
        $region13: #{tpu_custom_call.1} parent=11 // pred_check
          %p176 = pneg %p105
        $region14: #{tpu_custom_call.1} parent=11 // pred_check_branch
          %178 = sbr.rel (%p176) target = $region16
        $region15: #{tpu_custom_call.1} parent=11 // pred_region
          _
        $region16: #{tpu_custom_call.1} parent=11 // pred_fallthru
          _
      $region12: #{tpu_custom_call.1} parent=5 // pred_fallthru
        _
      %p179 = scmp.lt.s32.totalorder %s14, 4
      // Predicated region
      $region17: #{tpu_custom_call.1} parent=5 // pred_check
        %p180 = pneg %p179
      $region18: #{tpu_custom_call.1} parent=5 // pred_check_branch
        %182 = sbr.rel (%p180) target = $region20
      $region19: #{tpu_custom_call.1} parent=5 // pred_region
        // Predicated region
        $region21: #{tpu_custom_call.1} parent=19 // pred_check
          %p183 = pneg %p48
        $region22: #{tpu_custom_call.1} parent=19 // pred_check_branch
          %185 = sbr.rel (%p183) target = $region24
        $region23: #{tpu_custom_call.1} parent=19 // pred_region
          %s186 = smul.u32 8, %s22
          %p187 = scmp.lt.s32.totalorder %s21, 1
          %s188 = scalar_select %p187, %s21, 1
          %p189 = scmp.lt.s32.totalorder %s186, 23
          %s190 = scalar_select %p189, %s186, 23
          %s191 = smul.addr %s190, 3
          %s192 = smul.addr %s188, 72
          %s193 = sadd.s32 %s191, %s192
          %s194 = smul.addr %s193, 4
          %s195 = scalar_lea.vmem %s0, %s194
          %s196 = smul.u32 8, %s22
        $region24: #{tpu_custom_call.1} parent=19 // pred_fallthru
          _
        // Predicated region
        $region25: #{tpu_custom_call.1} parent=19 // pred_check
          %p197 = pneg %p78
        $region26: #{tpu_custom_call.1} parent=19 // pred_check_branch
          %199 = sbr.rel (%p197) target = $region28
        $region27: #{tpu_custom_call.1} parent=19 // pred_region
          %s200 = sadd.s32 %s22, 1
          %s201 = smul.u32 8, %s200
          %p202 = scmp.lt.s32.totalorder %s21, 1
          %s203 = scalar_select %p202, %s21, 1
          %p204 = scmp.lt.s32.totalorder %s201, 23
          %s205 = scalar_select %p204, %s201, 23
          %s206 = smul.addr %s205, 3
          %s207 = smul.addr %s203, 72
          %s208 = sadd.s32 %s206, %s207
          %s209 = smul.addr %s208, 4
          %s210 = scalar_lea.vmem %s1, %s209
          %s211 = sadd.s32 %s22, 1
          %s212 = smul.u32 8, %s211
        $region28: #{tpu_custom_call.1} parent=19 // pred_fallthru
          _
      $region20: #{tpu_custom_call.1} parent=5 // pred_fallthru
        _
      %p213 = scmp.le.s32.totalorder 1, %s14
      %p214 = scmp.lt.s32.totalorder %s14, 5
      %p215 = pnand %p213, %p214
      %p216 = pneg %p215
      // Predicated region
      $region29: #{tpu_custom_call.1} parent=5 // pred_check
        _
      $region30: #{tpu_custom_call.1} parent=5 // pred_check_branch
        %218 = sbr.rel (%p215) target = $region32
      $region31: #{tpu_custom_call.1} parent=5 // pred_region
        %s219 = ssub.s32 %s14, 1
        %s220 = smul.u32 8, %s24
        %p221 = scmp.lt.s32.totalorder %s23, 1
        %s222 = scalar_select %p221, %s23, 1
        %p223 = scmp.lt.s32.totalorder %s220, 23
        %s224 = scalar_select %p223, %s220, 23
        %s225 = smul.addr %s224, 3
        %s226 = smul.addr %s222, 72
        %s227 = sadd.s32 %s225, %s226
        %s228 = smul.addr %s227, 4
        %s229 = scalar_lea.vmem %s0, %s228
        %p230 = pneg %p54
        %p231 = pneg %p51
        %s232 = sadd.s32 %s24, 1
        %s233 = smul.u32 8, %s232
        %p234 = scmp.lt.s32.totalorder %s23, 1
        %s235 = scalar_select %p234, %s23, 1
        %p236 = scmp.lt.s32.totalorder %s233, 23
        %s237 = scalar_select %p236, %s233, 23
        %s238 = smul.addr %s237, 3
        %s239 = smul.addr %s235, 72
        %s240 = sadd.s32 %s238, %s239
        %s241 = smul.addr %s240, 4
        %s242 = scalar_lea.vmem %s1, %s241
        %p243 = pneg %p84
        %p244 = pneg %p81
        %p245 = pneg %p105
        %p246 = pneg %p102
        %p247 = pneg %p133
        %p248 = pneg %p130
        %s249 = smul.u32 8, %s24
        %p250 = scmp.lt.s32.totalorder %s23, 1
        %s251 = scalar_select %p250, %s23, 1
        %p252 = scmp.lt.s32.totalorder %s249, 15
        %s253 = scalar_select %p252, %s249, 15
        %s254 = smul.addr %s253, 2
        %s255 = smul.addr %s251, 32
        %s256 = sadd.s32 %s254, %s255
        %s257 = smul.addr %s256, 8
        %s258 = scalar_lea.vmem %s3, %s257
        %p259 = pneg %p161
        %p260 = pneg %p158
        %s261 = sand.u32 %s148, 1
        %s262 = scalar_lea.sflag [#allocation3], %s261
        %s263 = sand.u32 %s148, 1
        %s264 = smul.addr %s263, 2
        %s265 = scalar_lea.vmem [#allocation2], %s264
        %s266 = smul.u32 8, %s24
        %p267 = scmp.lt.s32.totalorder %s23, 1
        %s268 = scalar_select %p267, %s23, 1
        %p269 = scmp.lt.s32.totalorder %s266, 23
        %s270 = scalar_select %p269, %s266, 23
        %s271 = smul.addr %s270, 3
        %s272 = smul.addr %s268, 72
        %s273 = sadd.s32 %s271, %s272
        %s274 = smul.addr %s273, 4
        %s275 = scalar_lea.vmem %s0, %s274
        %s276 = smul.u32 8, %s24
        %s277 = sadd.s32 %s24, 1
        %s278 = smul.u32 8, %s277
        %p279 = scmp.lt.s32.totalorder %s23, 1
        %s280 = scalar_select %p279, %s23, 1
        %p281 = scmp.lt.s32.totalorder %s278, 23
        %s282 = scalar_select %p281, %s278, 23
        %s283 = smul.addr %s282, 3
        %s284 = smul.addr %s280, 72
        %s285 = sadd.s32 %s283, %s284
        %s286 = smul.addr %s285, 4
        %s287 = scalar_lea.vmem %s1, %s286
        %s288 = sadd.s32 %s24, 1
        %s289 = smul.u32 8, %s288
        %s290 = smul.u32 8, %s24
        %p291 = scmp.lt.s32.totalorder %s23, 1
        %s292 = scalar_select %p291, %s23, 1
        %p293 = scmp.lt.s32.totalorder %s290, 15
        %s294 = scalar_select %p293, %s290, 15
        %s295 = smul.addr %s294, 2
        %s296 = smul.addr %s292, 32
        %s297 = sadd.s32 %s295, %s296
        %s298 = smul.addr %s297, 8
        %s299 = scalar_lea.vmem %s3, %s298
        %s300 = smul.u32 8, %s24
        %v302 = vld [vmem:[%s275] sm:$0xf]
        %v303 = vld [vmem:[%s275 + $0x4] sm:$0xf]
        %v304 = vld [vmem:[%s275 + $0x8] sm:$0x1]
        %v305 = vld [vmem:[%s275 + $0xc] sm:$0xf]
        %v306 = vld [vmem:[%s275 + $0x10] sm:$0xf]
        %v307 = vld [vmem:[%s275 + $0x14] sm:$0x1]
        %v308 = vld [vmem:[%s275 + $0x18] sm:$0xf]
        %v309 = vld [vmem:[%s275 + $0x1c] sm:$0xf]
        %v310 = vld [vmem:[%s275 + $0x20] sm:$0x1]
        %v311 = vld [vmem:[%s275 + $0x24] sm:$0xf]
        %v312 = vld [vmem:[%s275 + $0x28] sm:$0xf]
        %v313 = vld [vmem:[%s275 + $0x2c] sm:$0x1]
        %v314 = vld [vmem:[%s275 + $0x30] sm:$0xf]
        %v315 = vld [vmem:[%s275 + $0x34] sm:$0xf]
        %v316 = vld [vmem:[%s275 + $0x38] sm:$0x1]
        %v317 = vld [vmem:[%s275 + $0x3c] sm:$0xf]
        %v318 = vld [vmem:[%s275 + $0x40] sm:$0xf]
        %v319 = vld [vmem:[%s275 + $0x44] sm:$0x1]
        %v320 = vld [vmem:[%s275 + $0x48] sm:$0xf]
        %v321 = vld [vmem:[%s275 + $0x4c] sm:$0xf]
        %v322 = vld [vmem:[%s275 + $0x50] sm:$0x1]
        %v323 = vld [vmem:[%s275 + $0x54] sm:$0xf]
        %v324 = vld [vmem:[%s275 + $0x58] sm:$0xf]
        %v325 = vld [vmem:[%s275 + $0x5c] sm:$0x1]
        %v326 = vld [vmem:[%s287] sm:$0xf]
        %v327 = vld [vmem:[%s287 + $0x4] sm:$0xf]
        %v328 = vld [vmem:[%s287 + $0x8] sm:$0x1]
        %v329 = vld [vmem:[%s287 + $0xc] sm:$0xf]
        %v330 = vld [vmem:[%s287 + $0x10] sm:$0xf]
        %v331 = vld [vmem:[%s287 + $0x14] sm:$0x1]
        %vm332 = vsmask.f32 3328
        %vm333 = vsmask.f32 7440
        %vm334 = vmor %vm332, %vm333
        %v336 = vshrl.u32 %v302, 16
        %v338 = vrot.slane %v336, 4
        %v339 = vshll.u32 %v302, 16
        %v341 = vrot.slane %v339, 5
        %v342 = vor.u32 %v338, %v341
        %v343 = vrot.slane %v342, 4
        %v345 = vshll.u32 %v303, 16
        %v347 = vrot.slane %v345, 5
        %v348 = vsel %vm334, %v343, %v347
        %v349 = vshrl.u32 %v303, 16
        %v351 = vrot.slane %v349, 4
        %v352 = vor.u32 %v351, %v347
        %v353 = vrot.slane %v352, 4
        %v355 = vshll.u32 %v304, 16
        %v357 = vrot.slane %v355, 5
        %v358 = vsel %vm334, %v353, %v357
        %v360 = vshrl.u32 %v305, 16
        %v362 = vrot.slane %v360, 4
        %v363 = vshll.u32 %v305, 16
        %v365 = vrot.slane %v363, 5
        %v366 = vor.u32 %v362, %v365
        %v367 = vrot.slane %v366, 4
        %v369 = vshll.u32 %v306, 16
        %v371 = vrot.slane %v369, 5
        %v372 = vsel %vm334, %v367, %v371
        %v373 = vshrl.u32 %v306, 16
        %v375 = vrot.slane %v373, 4
        %v376 = vor.u32 %v375, %v371
        %v377 = vrot.slane %v376, 4
        %v379 = vshll.u32 %v307, 16
        %v381 = vrot.slane %v379, 5
        %v382 = vsel %vm334, %v377, %v381
        %v384 = vshrl.u32 %v308, 16
        %v386 = vrot.slane %v384, 4
        %v387 = vshll.u32 %v308, 16
        %v389 = vrot.slane %v387, 5
        %v390 = vor.u32 %v386, %v389
        %v391 = vrot.slane %v390, 4
        %v393 = vshll.u32 %v309, 16
        %v395 = vrot.slane %v393, 5
        %v396 = vsel %vm334, %v391, %v395
        %v397 = vshrl.u32 %v309, 16
        %v399 = vrot.slane %v397, 4
        %v400 = vor.u32 %v399, %v395
        %v401 = vrot.slane %v400, 4
        %v403 = vshll.u32 %v310, 16
        %v405 = vrot.slane %v403, 5
        %v406 = vsel %vm334, %v401, %v405
        %v408 = vshrl.u32 %v311, 16
        %v410 = vrot.slane %v408, 4
        %v411 = vshll.u32 %v311, 16
        %v413 = vrot.slane %v411, 5
        %v414 = vor.u32 %v410, %v413
        %v415 = vrot.slane %v414, 4
        %v417 = vshll.u32 %v312, 16
        %v419 = vrot.slane %v417, 5
        %v420 = vsel %vm334, %v415, %v419
        %v421 = vshrl.u32 %v312, 16
        %v423 = vrot.slane %v421, 4
        %v424 = vor.u32 %v423, %v419
        %v425 = vrot.slane %v424, 4
        %v427 = vshll.u32 %v313, 16
        %v429 = vrot.slane %v427, 5
        %v430 = vsel %vm334, %v425, %v429
        %v432 = vshrl.u32 %v314, 16
        %v434 = vrot.slane %v432, 4
        %v435 = vshll.u32 %v314, 16
        %v437 = vrot.slane %v435, 5
        %v438 = vor.u32 %v434, %v437
        %v439 = vrot.slane %v438, 4
        %v441 = vshll.u32 %v315, 16
        %v443 = vrot.slane %v441, 5
        %v444 = vsel %vm334, %v439, %v443
        %v445 = vshrl.u32 %v315, 16
        %v447 = vrot.slane %v445, 4
        %v448 = vor.u32 %v447, %v443
        %v449 = vrot.slane %v448, 4
        %v451 = vshll.u32 %v316, 16
        %v453 = vrot.slane %v451, 5
        %v454 = vsel %vm334, %v449, %v453
        %v456 = vshrl.u32 %v317, 16
        %v458 = vrot.slane %v456, 4
        %v459 = vshll.u32 %v317, 16
        %v461 = vrot.slane %v459, 5
        %v462 = vor.u32 %v458, %v461
        %v463 = vrot.slane %v462, 4
        %v465 = vshll.u32 %v318, 16
        %v467 = vrot.slane %v465, 5
        %v468 = vsel %vm334, %v463, %v467
        %v469 = vshrl.u32 %v318, 16
        %v471 = vrot.slane %v469, 4
        %v472 = vor.u32 %v471, %v467
        %v473 = vrot.slane %v472, 4
        %v475 = vshll.u32 %v319, 16
        %v477 = vrot.slane %v475, 5
        %v478 = vsel %vm334, %v473, %v477
        %v480 = vshrl.u32 %v320, 16
        %v482 = vrot.slane %v480, 4
        %v483 = vshll.u32 %v320, 16
        %v485 = vrot.slane %v483, 5
        %v486 = vor.u32 %v482, %v485
        %v487 = vrot.slane %v486, 4
        %v489 = vshll.u32 %v321, 16
        %v491 = vrot.slane %v489, 5
        %v492 = vsel %vm334, %v487, %v491
        %v493 = vshrl.u32 %v321, 16
        %v495 = vrot.slane %v493, 4
        %v496 = vor.u32 %v495, %v491
        %v497 = vrot.slane %v496, 4
        %v499 = vshll.u32 %v322, 16
        %v501 = vrot.slane %v499, 5
        %v502 = vsel %vm334, %v497, %v501
        %v504 = vshrl.u32 %v323, 16
        %v506 = vrot.slane %v504, 4
        %v507 = vshll.u32 %v323, 16
        %v509 = vrot.slane %v507, 5
        %v510 = vor.u32 %v506, %v509
        %v511 = vrot.slane %v510, 4
        %v513 = vshll.u32 %v324, 16
        %v515 = vrot.slane %v513, 5
        %v516 = vsel %vm334, %v511, %v515
        %v517 = vshrl.u32 %v324, 16
        %v519 = vrot.slane %v517, 4
        %v520 = vor.u32 %v519, %v515
        %v521 = vrot.slane %v520, 4
        %v523 = vshll.u32 %v325, 16
        %v525 = vrot.slane %v523, 5
        %v526 = vsel %vm334, %v521, %v525
        %vm551 = vcmask 1042432
        %vm552 = vcmask 1046532
        %vm553 = vmor %vm551, %vm552
        %v554 = vrot.slane %v302, 5
        %v555 = vrot.slane %v554, 4
        %v556 = vrot.slane %v303, 5
        %v557 = vsel %vm553, %v555, %v556
        %v558 = vrot.slane %v556, 4
        %v559 = vrot.slane %v304, 5
        %v560 = vsel %vm553, %v558, %v559
        %v561 = vrot.slane %v305, 5
        %v562 = vrot.slane %v561, 4
        %v563 = vrot.slane %v306, 5
        %v564 = vsel %vm553, %v562, %v563
        %v565 = vrot.slane %v563, 4
        %v566 = vrot.slane %v307, 5
        %v567 = vsel %vm553, %v565, %v566
        %v568 = vrot.slane %v308, 5
        %v569 = vrot.slane %v568, 4
        %v570 = vrot.slane %v309, 5
        %v571 = vsel %vm553, %v569, %v570
        %v572 = vrot.slane %v570, 4
        %v573 = vrot.slane %v310, 5
        %v574 = vsel %vm553, %v572, %v573
        %v575 = vrot.slane %v311, 5
        %v576 = vrot.slane %v575, 4
        %v577 = vrot.slane %v312, 5
        %v578 = vsel %vm553, %v576, %v577
        %v579 = vrot.slane %v577, 4
        %v580 = vrot.slane %v313, 5
        %v581 = vsel %vm553, %v579, %v580
        %v582 = vrot.slane %v314, 5
        %v583 = vrot.slane %v582, 4
        %v584 = vrot.slane %v315, 5
        %v585 = vsel %vm553, %v583, %v584
        %v586 = vrot.slane %v584, 4
        %v587 = vrot.slane %v316, 5
        %v588 = vsel %vm553, %v586, %v587
        %v589 = vrot.slane %v317, 5
        %v590 = vrot.slane %v589, 4
        %v591 = vrot.slane %v318, 5
        %v592 = vsel %vm553, %v590, %v591
        %v593 = vrot.slane %v591, 4
        %v594 = vrot.slane %v319, 5
        %v595 = vsel %vm553, %v593, %v594
        %v596 = vrot.slane %v320, 5
        %v597 = vrot.slane %v596, 4
        %v598 = vrot.slane %v321, 5
        %v599 = vsel %vm553, %v597, %v598
        %v600 = vrot.slane %v598, 4
        %v601 = vrot.slane %v322, 5
        %v602 = vsel %vm553, %v600, %v601
        %v603 = vrot.slane %v323, 5
        %v604 = vrot.slane %v603, 4
        %v605 = vrot.slane %v324, 5
        %v606 = vsel %vm553, %v604, %v605
        %v607 = vrot.slane %v605, 4
        %v608 = vrot.slane %v325, 5
        %v609 = vsel %vm553, %v607, %v608
        %v611 = vshrl.u32 %v326, 16
        %v613 = vrot.slane %v611, 4
        %v614 = vshll.u32 %v326, 16
        %v616 = vrot.slane %v614, 5
        %v617 = vor.u32 %v613, %v616
        %v618 = vrot.slane %v617, 4
        %v620 = vshll.u32 %v327, 16
        %v622 = vrot.slane %v620, 5
        %v623 = vsel %vm334, %v618, %v622
        %v624 = vshrl.u32 %v327, 16
        %v626 = vrot.slane %v624, 4
        %v627 = vor.u32 %v626, %v622
        %v628 = vrot.slane %v627, 4
        %v630 = vshll.u32 %v328, 16
        %v632 = vrot.slane %v630, 5
        %v633 = vsel %vm334, %v628, %v632
        %v637 = vrot.slane %v326, 5
        %v638 = vrot.slane %v637, 4
        %v639 = vrot.slane %v327, 5
        %v640 = vsel %vm553, %v638, %v639
        %v641 = vrot.slane %v639, 4
        %v642 = vrot.slane %v328, 5
        %v643 = vsel %vm553, %v641, %v642
        %v645 = vshrl.u32 %v329, 16
        %v647 = vrot.slane %v645, 4
        %v648 = vshll.u32 %v329, 16
        %v650 = vrot.slane %v648, 5
        %v651 = vor.u32 %v647, %v650
        %v652 = vrot.slane %v651, 4
        %v654 = vshll.u32 %v330, 16
        %v656 = vrot.slane %v654, 5
        %v657 = vsel %vm334, %v652, %v656
        %v658 = vshrl.u32 %v330, 16
        %v660 = vrot.slane %v658, 4
        %v661 = vor.u32 %v660, %v656
        %v662 = vrot.slane %v661, 4
        %v664 = vshll.u32 %v331, 16
        %v666 = vrot.slane %v664, 5
        %v667 = vsel %vm334, %v662, %v666
        %v671 = vrot.slane %v329, 5
        %v672 = vrot.slane %v671, 4
        %v673 = vrot.slane %v330, 5
        %v674 = vsel %vm553, %v672, %v673
        %v675 = vrot.slane %v673, 4
        %v676 = vrot.slane %v331, 5
        %v677 = vsel %vm553, %v675, %v676
        %v678 = vunpack.c.l.b16 %v302
        %v679 = vunpack.c.l.b16 %v303
        %v680 = vunpack.c.l.b16 %v305
        %v681 = vunpack.c.l.b16 %v306
        %v682 = vunpack.c.l.b16 %v308
        %v683 = vunpack.c.l.b16 %v309
        %v684 = vunpack.c.l.b16 %v311
        %v685 = vunpack.c.l.b16 %v312
        %v686 = vunpack.c.l.b16 %v314
        %v687 = vunpack.c.l.b16 %v315
        %v688 = vunpack.c.l.b16 %v317
        %v689 = vunpack.c.l.b16 %v318
        %v690 = vunpack.c.l.b16 %v320
        %v691 = vunpack.c.l.b16 %v321
        %v692 = vunpack.c.l.b16 %v323
        %v693 = vunpack.c.l.b16 %v324
        %v694 = vpack.c.b16 %v679, %v678
        %v695 = vpack.c.b16 %v681, %v680
        %v696 = vpack.c.b16 %v683, %v682
        %v697 = vpack.c.b16 %v685, %v684
        %v698 = vpack.c.b16 %v687, %v686
        %v699 = vpack.c.b16 %v689, %v688
        %v700 = vpack.c.b16 %v691, %v690
        %v701 = vpack.c.b16 %v693, %v692
        %v702 = vunpack.c.l.b16 %v348
        %v703 = vunpack.c.l.b16 %v358
        %v704 = vunpack.c.l.b16 %v372
        %v705 = vunpack.c.l.b16 %v382
        %v706 = vunpack.c.l.b16 %v396
        %v707 = vunpack.c.l.b16 %v406
        %v708 = vunpack.c.l.b16 %v420
        %v709 = vunpack.c.l.b16 %v430
        %v710 = vunpack.c.l.b16 %v444
        %v711 = vunpack.c.l.b16 %v454
        %v712 = vunpack.c.l.b16 %v468
        %v713 = vunpack.c.l.b16 %v478
        %v714 = vunpack.c.l.b16 %v492
        %v715 = vunpack.c.l.b16 %v502
        %v716 = vunpack.c.l.b16 %v516
        %v717 = vunpack.c.l.b16 %v526
        %v718 = vpack.c.b16 %v703, %v702
        %v719 = vpack.c.b16 %v705, %v704
        %v720 = vpack.c.b16 %v707, %v706
        %v721 = vpack.c.b16 %v709, %v708
        %v722 = vpack.c.b16 %v711, %v710
        %v723 = vpack.c.b16 %v713, %v712
        %v724 = vpack.c.b16 %v715, %v714
        %v725 = vpack.c.b16 %v717, %v716
        %726 = vrot.lane.b32.xlu0 %v718, 4
        %v727 = vpop.permute.xlu0 %726
        %728 = vrot.lane.b32.xlu0 %v719, 4
        %v729 = vpop.permute.xlu0 %728
        %730 = vrot.lane.b32.xlu0 %v720, 4
        %v731 = vpop.permute.xlu0 %730
        %732 = vrot.lane.b32.xlu0 %v721, 4
        %v733 = vpop.permute.xlu0 %732
        %734 = vrot.lane.b32.xlu0 %v722, 4
        %v735 = vpop.permute.xlu0 %734
        %736 = vrot.lane.b32.xlu0 %v723, 4
        %v737 = vpop.permute.xlu0 %736
        %738 = vrot.lane.b32.xlu0 %v724, 4
        %v739 = vpop.permute.xlu0 %738
        %740 = vrot.lane.b32.xlu0 %v725, 4
        %v741 = vpop.permute.xlu0 %740
        %v742 = vunpack.c.l.b16 %v557
        %v743 = vunpack.c.l.b16 %v560
        %v744 = vunpack.c.l.b16 %v564
        %v745 = vunpack.c.l.b16 %v567
        %v746 = vunpack.c.l.b16 %v571
        %v747 = vunpack.c.l.b16 %v574
        %v748 = vunpack.c.l.b16 %v578
        %v749 = vunpack.c.l.b16 %v581
        %v750 = vunpack.c.l.b16 %v585
        %v751 = vunpack.c.l.b16 %v588
        %v752 = vunpack.c.l.b16 %v592
        %v753 = vunpack.c.l.b16 %v595
        %v754 = vunpack.c.l.b16 %v599
        %v755 = vunpack.c.l.b16 %v602
        %v756 = vunpack.c.l.b16 %v606
        %v757 = vunpack.c.l.b16 %v609
        %v758 = vpack.c.b16 %v743, %v742
        %v759 = vpack.c.b16 %v745, %v744
        %v760 = vpack.c.b16 %v747, %v746
        %v761 = vpack.c.b16 %v749, %v748
        %v762 = vpack.c.b16 %v751, %v750
        %v763 = vpack.c.b16 %v753, %v752
        %v764 = vpack.c.b16 %v755, %v754
        %v765 = vpack.c.b16 %v757, %v756
        %766 = vrot.lane.b32.xlu0 %v758, 8
        %v767 = vpop.permute.xlu0 %766
        %768 = vrot.lane.b32.xlu0 %v759, 8
        %v769 = vpop.permute.xlu0 %768
        %770 = vrot.lane.b32.xlu0 %v760, 8
        %v771 = vpop.permute.xlu0 %770
        %772 = vrot.lane.b32.xlu0 %v761, 8
        %v773 = vpop.permute.xlu0 %772
        %774 = vrot.lane.b32.xlu0 %v762, 8
        %v775 = vpop.permute.xlu0 %774
        %776 = vrot.lane.b32.xlu0 %v763, 8
        %v777 = vpop.permute.xlu0 %776
        %778 = vrot.lane.b32.xlu0 %v764, 8
        %v779 = vpop.permute.xlu0 %778
        %780 = vrot.lane.b32.xlu0 %v765, 8
        %v781 = vpop.permute.xlu0 %780
        %v782 = vunpack.c.l.b16 %v326
        %v783 = vunpack.c.l.b16 %v327
        %v784 = vpack.c.b16 %v783, %v782
        %785 = vrot.lane.b32.xlu0 %v695, 12
        %v786 = vpop.permute.xlu0 %785
        %787 = vrot.lane.b32.xlu0 %v696, 12
        %v788 = vpop.permute.xlu0 %787
        %789 = vrot.lane.b32.xlu0 %v697, 12
        %v790 = vpop.permute.xlu0 %789
        %791 = vrot.lane.b32.xlu0 %v698, 12
        %v792 = vpop.permute.xlu0 %791
        %793 = vrot.lane.b32.xlu0 %v699, 12
        %v794 = vpop.permute.xlu0 %793
        %795 = vrot.lane.b32.xlu0 %v700, 12
        %v796 = vpop.permute.xlu0 %795
        %797 = vrot.lane.b32.xlu0 %v701, 12
        %v798 = vpop.permute.xlu0 %797
        %799 = vrot.lane.b32.xlu0 %v784, 12
        %v800 = vpop.permute.xlu0 %799
        %v801 = vunpack.c.l.b16 %v623
        %v802 = vunpack.c.l.b16 %v633
        %v803 = vpack.c.b16 %v802, %v801
        %804 = vrot.lane.b32.xlu0 %v719, 16
        %v805 = vpop.permute.xlu0 %804
        %806 = vrot.lane.b32.xlu0 %v720, 16
        %v807 = vpop.permute.xlu0 %806
        %808 = vrot.lane.b32.xlu0 %v721, 16
        %v809 = vpop.permute.xlu0 %808
        %810 = vrot.lane.b32.xlu0 %v722, 16
        %v811 = vpop.permute.xlu0 %810
        %812 = vrot.lane.b32.xlu0 %v723, 16
        %v813 = vpop.permute.xlu0 %812
        %814 = vrot.lane.b32.xlu0 %v724, 16
        %v815 = vpop.permute.xlu0 %814
        %816 = vrot.lane.b32.xlu0 %v725, 16
        %v817 = vpop.permute.xlu0 %816
        %818 = vrot.lane.b32.xlu0 %v803, 16
        %v819 = vpop.permute.xlu0 %818
        %v820 = vunpack.c.l.b16 %v640
        %v821 = vunpack.c.l.b16 %v643
        %v822 = vpack.c.b16 %v821, %v820
        %823 = vrot.lane.b32.xlu0 %v759, 20
        %v824 = vpop.permute.xlu0 %823
        %825 = vrot.lane.b32.xlu0 %v760, 20
        %v826 = vpop.permute.xlu0 %825
        %827 = vrot.lane.b32.xlu0 %v761, 20
        %v828 = vpop.permute.xlu0 %827
        %829 = vrot.lane.b32.xlu0 %v762, 20
        %v830 = vpop.permute.xlu0 %829
        %831 = vrot.lane.b32.xlu0 %v763, 20
        %v832 = vpop.permute.xlu0 %831
        %833 = vrot.lane.b32.xlu0 %v764, 20
        %v834 = vpop.permute.xlu0 %833
        %835 = vrot.lane.b32.xlu0 %v765, 20
        %v836 = vpop.permute.xlu0 %835
        %837 = vrot.lane.b32.xlu0 %v822, 20
        %v838 = vpop.permute.xlu0 %837
        %v839 = vunpack.c.l.b16 %v329
        %v840 = vunpack.c.l.b16 %v330
        %v841 = vpack.c.b16 %v840, %v839
        %842 = vrot.lane.b32.xlu0 %v696, 24
        %v843 = vpop.permute.xlu0 %842
        %844 = vrot.lane.b32.xlu0 %v697, 24
        %v845 = vpop.permute.xlu0 %844
        %846 = vrot.lane.b32.xlu0 %v698, 24
        %v847 = vpop.permute.xlu0 %846
        %848 = vrot.lane.b32.xlu0 %v699, 24
        %v849 = vpop.permute.xlu0 %848
        %850 = vrot.lane.b32.xlu0 %v700, 24
        %v851 = vpop.permute.xlu0 %850
        %852 = vrot.lane.b32.xlu0 %v701, 24
        %v853 = vpop.permute.xlu0 %852
        %854 = vrot.lane.b32.xlu0 %v784, 24
        %v855 = vpop.permute.xlu0 %854
        %856 = vrot.lane.b32.xlu0 %v841, 24
        %v857 = vpop.permute.xlu0 %856
        %v858 = vunpack.c.l.b16 %v657
        %v859 = vunpack.c.l.b16 %v667
        %v860 = vpack.c.b16 %v859, %v858
        %861 = vrot.lane.b32.xlu0 %v720, 28
        %v862 = vpop.permute.xlu0 %861
        %863 = vrot.lane.b32.xlu0 %v721, 28
        %v864 = vpop.permute.xlu0 %863
        %865 = vrot.lane.b32.xlu0 %v722, 28
        %v866 = vpop.permute.xlu0 %865
        %867 = vrot.lane.b32.xlu0 %v723, 28
        %v868 = vpop.permute.xlu0 %867
        %869 = vrot.lane.b32.xlu0 %v724, 28
        %v870 = vpop.permute.xlu0 %869
        %871 = vrot.lane.b32.xlu0 %v725, 28
        %v872 = vpop.permute.xlu0 %871
        %873 = vrot.lane.b32.xlu0 %v803, 28
        %v874 = vpop.permute.xlu0 %873
        %875 = vrot.lane.b32.xlu0 %v860, 28
        %v876 = vpop.permute.xlu0 %875
        %v877 = vunpack.c.l.b16 %v674
        %v878 = vunpack.c.l.b16 %v677
        %v879 = vpack.c.b16 %v878, %v877
        %880 = vrot.lane.b32.xlu0 %v760, 32
        %v881 = vpop.permute.xlu0 %880
        %882 = vrot.lane.b32.xlu0 %v761, 32
        %v883 = vpop.permute.xlu0 %882
        %884 = vrot.lane.b32.xlu0 %v762, 32
        %v885 = vpop.permute.xlu0 %884
        %886 = vrot.lane.b32.xlu0 %v763, 32
        %v887 = vpop.permute.xlu0 %886
        %888 = vrot.lane.b32.xlu0 %v764, 32
        %v889 = vpop.permute.xlu0 %888
        %890 = vrot.lane.b32.xlu0 %v765, 32
        %v891 = vpop.permute.xlu0 %890
        %892 = vrot.lane.b32.xlu0 %v822, 32
        %v893 = vpop.permute.xlu0 %892
        %894 = vrot.lane.b32.xlu0 %v879, 32
        %v895 = vpop.permute.xlu0 %894
        %vm896 = vcmask 31744
        %v899 = vsel %vm896, %v694, %v727
        %v902 = vsel %vm896, %v695, %v729
        %v905 = vsel %vm896, %v696, %v731
        %v908 = vsel %vm896, %v697, %v733
        %v911 = vsel %vm896, %v698, %v735
        %v914 = vsel %vm896, %v699, %v737
        %v917 = vsel %vm896, %v700, %v739
        %v920 = vsel %vm896, %v701, %v741
        %vm921 = vcmask 64512
        %v923 = vsel %vm921, %v899, %v767
        %v925 = vsel %vm921, %v902, %v769
        %v927 = vsel %vm921, %v905, %v771
        %v929 = vsel %vm921, %v908, %v773
        %v931 = vsel %vm921, %v911, %v775
        %v933 = vsel %vm921, %v914, %v777
        %v935 = vsel %vm921, %v917, %v779
        %v937 = vsel %vm921, %v920, %v781
        %vm938 = vcmask 97280
        %v940 = vsel %vm938, %v923, %v786
        %v942 = vsel %vm938, %v925, %v788
        %v944 = vsel %vm938, %v927, %v790
        %v946 = vsel %vm938, %v929, %v792
        %v948 = vsel %vm938, %v931, %v794
        %v950 = vsel %vm938, %v933, %v796
        %v952 = vsel %vm938, %v935, %v798
        %v954 = vsel %vm938, %v937, %v800
        %vm955 = vcmask 130048
        %v957 = vsel %vm955, %v940, %v805
        %v959 = vsel %vm955, %v942, %v807
        %v961 = vsel %vm955, %v944, %v809
        %v963 = vsel %vm955, %v946, %v811
        %v965 = vsel %vm955, %v948, %v813
        %v967 = vsel %vm955, %v950, %v815
        %v969 = vsel %vm955, %v952, %v817
        %v971 = vsel %vm955, %v954, %v819
        %vm972 = vcmask 162816
        %v974 = vsel %vm972, %v957, %v824
        %v976 = vsel %vm972, %v959, %v826
        %v978 = vsel %vm972, %v961, %v828
        %v980 = vsel %vm972, %v963, %v830
        %v982 = vsel %vm972, %v965, %v832
        %v984 = vsel %vm972, %v967, %v834
        %v986 = vsel %vm972, %v969, %v836
        %v988 = vsel %vm972, %v971, %v838
        %vm989 = vcmask 195584
        %v991 = vsel %vm989, %v974, %v843
        %v993 = vsel %vm989, %v976, %v845
        %v995 = vsel %vm989, %v978, %v847
        %v997 = vsel %vm989, %v980, %v849
        %v999 = vsel %vm989, %v982, %v851
        %v1001 = vsel %vm989, %v984, %v853
        %v1003 = vsel %vm989, %v986, %v855
        %v1005 = vsel %vm989, %v988, %v857
        %vm1006 = vcmask 228352
        %v1008 = vsel %vm1006, %v991, %v862
        %v1010 = vsel %vm1006, %v993, %v864
        %v1012 = vsel %vm1006, %v995, %v866
        %v1014 = vsel %vm1006, %v997, %v868
        %v1016 = vsel %vm1006, %v999, %v870
        %v1018 = vsel %vm1006, %v1001, %v872
        %v1020 = vsel %vm1006, %v1003, %v874
        %v1022 = vsel %vm1006, %v1005, %v876
        %vm1023 = vcmask 261120
        %v1025 = vsel %vm1023, %v1008, %v881
        %v1027 = vsel %vm1023, %v1010, %v883
        %v1029 = vsel %vm1023, %v1012, %v885
        %v1031 = vsel %vm1023, %v1014, %v887
        %v1033 = vsel %vm1023, %v1016, %v889
        %v1035 = vsel %vm1023, %v1018, %v891
        %v1037 = vsel %vm1023, %v1020, %v893
        %v1039 = vsel %vm1023, %v1022, %v895
        %v1040 = vld [vmem:[%s2] sm:$0xf]
        %v1041 = vld [vmem:[%s2 + $0x4] sm:$0xf]
        %v1042 = vld [vmem:[%s2 + $0x8] sm:$0xf]
        %v1043 = vld [vmem:[%s2 + $0xc] sm:$0xf]
        %v1044 = vld [vmem:[%s2 + $0x10] sm:$0x3]
        %v1050 = vunpack.c.l.b16 %v1040
        %v1051 = vunpack.c.l.b16 %v1041
        %v1052 = vunpack.c.l.b16 %v1042
        %v1053 = vunpack.c.l.b16 %v1043
        %v1054 = vunpack.c.l.b16 %v1044
        %v1055 = vpack.c.b16 %v1051, %v1050
        %v1056 = vpack.c.b16 %v1053, %v1052
        %v1057 = vpack.c.b16 %v1054, %v1054
        %vm1060 = vcmask 293888
        %v1061 = vsel %vm1060, %v1025, 0
        %v1063 = vsel %vm1060, %v1027, 0
        %v1065 = vsel %vm1060, %v1029, 0
        %v1067 = vsel %vm1060, %v1031, 0
        %v1069 = vsel %vm1060, %v1033, 0
        %v1071 = vsel %vm1060, %v1035, 0
        %v1073 = vsel %vm1060, %v1037, 0
        %v1075 = vsel %vm1060, %v1039, 0
        %vm1077 = vcmask 1041408
        %v1079 = vsel %vm1077, %v1057, 0
        %1081 = vmatpush.bf16.msra.mxu0 0
        %1082 = vmatpush.bf16.msra.mxu0 0
        %1083 = vmatpush.bf16.msra.mxu0 0
        %1084 = vmatpush.bf16.msra.mxu0 0
        %1085 = vmatpush.bf16.msra.mxu0 0
        %1086 = vmatpush.bf16.msra.mxu0 %v1079
        %1087 = vmatpush.bf16.msra.mxu0 %v1056
        %1088 = vmatpush.bf16.msra.mxu0 %v1055
        %1089 = vmatmul.bf16.gmra.mxu0 %v1061
        %v1090 = vpop.f32.mrf.mxu0
        %v1091 = vadd.f32 0.0, %v1090
        %v1092 = vpop.f32.mrf.mxu0
        %v1093 = vadd.f32 0.0, %v1092
        %1094 = vmatmul.bf16.gmra.mxu0 %v1063
        %v1095 = vpop.f32.mrf.mxu0
        %v1096 = vadd.f32 0.0, %v1095
        %v1097 = vpop.f32.mrf.mxu0
        %v1098 = vadd.f32 0.0, %v1097
        %1099 = vmatmul.bf16.gmra.mxu0 %v1065
        %v1100 = vpop.f32.mrf.mxu0
        %v1101 = vadd.f32 0.0, %v1100
        %v1102 = vpop.f32.mrf.mxu0
        %v1103 = vadd.f32 0.0, %v1102
        %1104 = vmatmul.bf16.gmra.mxu0 %v1067
        %v1105 = vpop.f32.mrf.mxu0
        %v1106 = vadd.f32 0.0, %v1105
        %v1107 = vpop.f32.mrf.mxu0
        %v1108 = vadd.f32 0.0, %v1107
        %1109 = vmatmul.bf16.gmra.mxu0 %v1069
        %v1110 = vpop.f32.mrf.mxu0
        %v1111 = vadd.f32 0.0, %v1110
        %v1112 = vpop.f32.mrf.mxu0
        %v1113 = vadd.f32 0.0, %v1112
        %1114 = vmatmul.bf16.gmra.mxu0 %v1071
        %v1115 = vpop.f32.mrf.mxu0
        %v1116 = vadd.f32 0.0, %v1115
        %v1117 = vpop.f32.mrf.mxu0
        %v1118 = vadd.f32 0.0, %v1117
        %1119 = vmatmul.bf16.gmra.mxu0 %v1073
        %v1120 = vpop.f32.mrf.mxu0
        %v1121 = vadd.f32 0.0, %v1120
        %v1122 = vpop.f32.mrf.mxu0
        %v1123 = vadd.f32 0.0, %v1122
        %1124 = vmatmul.bf16.gmra.mxu0 %v1075
        %v1125 = vpop.f32.mrf.mxu0
        %v1126 = vadd.f32 0.0, %v1125
        %v1127 = vpop.f32.mrf.mxu0
        %v1128 = vadd.f32 0.0, %v1127
        %1129 = vdwg.mxu0
        %1130 = vst.msk [vmem:[%s299] sm:$0xff] %vm921, %v1091
        %1131 = vst.msk [vmem:[%s299 + $0x8] sm:$0xff] %vm921, %v1093
        %1132 = vst.msk [vmem:[%s299 + $0x10] sm:$0xff] %vm921, %v1096
        %1133 = vst.msk [vmem:[%s299 + $0x18] sm:$0xff] %vm921, %v1098
        %1134 = vst.msk [vmem:[%s299 + $0x20] sm:$0xff] %vm921, %v1101
        %1135 = vst.msk [vmem:[%s299 + $0x28] sm:$0xff] %vm921, %v1103
        %1136 = vst.msk [vmem:[%s299 + $0x30] sm:$0xff] %vm921, %v1106
        %1137 = vst.msk [vmem:[%s299 + $0x38] sm:$0xff] %vm921, %v1108
        %1138 = vst.msk [vmem:[%s299 + $0x40] sm:$0xff] %vm921, %v1111
        %1139 = vst.msk [vmem:[%s299 + $0x48] sm:$0xff] %vm921, %v1113
        %1140 = vst.msk [vmem:[%s299 + $0x50] sm:$0xff] %vm921, %v1116
        %1141 = vst.msk [vmem:[%s299 + $0x58] sm:$0xff] %vm921, %v1118
        %1142 = vst.msk [vmem:[%s299 + $0x60] sm:$0xff] %vm921, %v1121
        %1143 = vst.msk [vmem:[%s299 + $0x68] sm:$0xff] %vm921, %v1123
        %1144 = vst.msk [vmem:[%s299 + $0x70] sm:$0xff] %vm921, %v1126
        %1145 = vst.msk [vmem:[%s299 + $0x78] sm:$0xff] %vm921, %v1128
        %v1146 = vsel %vm921, %v1091, 0.0
        %v1147 = vsel %vm921, %v1093, 0.0
        %v1148 = vadd.f32 %v1146, %v1147
        %v1149 = vsel %vm921, %v1096, 0.0
        %v1150 = vadd.f32 %v1148, %v1149
        %v1151 = vsel %vm921, %v1098, 0.0
        %v1152 = vadd.f32 %v1150, %v1151
        %v1153 = vsel %vm921, %v1101, 0.0
        %v1154 = vadd.f32 %v1152, %v1153
        %v1155 = vsel %vm921, %v1103, 0.0
        %v1156 = vadd.f32 %v1154, %v1155
        %v1157 = vsel %vm921, %v1106, 0.0
        %v1158 = vadd.f32 %v1156, %v1157
        %v1159 = vsel %vm921, %v1108, 0.0
        %v1160 = vadd.f32 %v1158, %v1159
        %v1161 = vsel %vm921, %v1111, 0.0
        %v1162 = vadd.f32 %v1160, %v1161
        %v1163 = vsel %vm921, %v1113, 0.0
        %v1164 = vadd.f32 %v1162, %v1163
        %v1165 = vsel %vm921, %v1116, 0.0
        %v1166 = vadd.f32 %v1164, %v1165
        %v1167 = vsel %vm921, %v1118, 0.0
        %v1168 = vadd.f32 %v1166, %v1167
        %v1169 = vsel %vm921, %v1121, 0.0
        %v1170 = vadd.f32 %v1168, %v1169
        %v1171 = vsel %vm921, %v1123, 0.0
        %v1172 = vadd.f32 %v1170, %v1171
        %v1173 = vsel %vm921, %v1126, 0.0
        %v1174 = vadd.f32 %v1172, %v1173
        %v1175 = vsel %vm921, %v1128, 0.0
        %v1176 = vadd.f32 %v1174, %v1175
        %v1177 = vrot.slane %v1176, 4
        %v1178 = vadd.f32 %v1176, %v1177
        %v1179 = vrot.slane %v1178, 2
        %v1180 = vadd.f32 %v1178, %v1179
        %v1181 = vrot.slane %v1180, 1
        %v1182 = vadd.f32 %v1180, %v1181
        %v1183 = vmul.f32 %v1091, %v1091
        %v1184 = vmul.f32 %v1093, %v1093
        %v1185 = vmul.f32 %v1096, %v1096
        %v1186 = vmul.f32 %v1098, %v1098
        %v1187 = vmul.f32 %v1101, %v1101
        %v1188 = vmul.f32 %v1103, %v1103
        %v1189 = vmul.f32 %v1106, %v1106
        %v1190 = vmul.f32 %v1108, %v1108
        %v1191 = vmul.f32 %v1111, %v1111
        %v1192 = vmul.f32 %v1113, %v1113
        %v1193 = vmul.f32 %v1116, %v1116
        %v1194 = vmul.f32 %v1118, %v1118
        %v1195 = vmul.f32 %v1121, %v1121
        %v1196 = vmul.f32 %v1123, %v1123
        %v1197 = vmul.f32 %v1126, %v1126
        %v1198 = vmul.f32 %v1128, %v1128
        %v1199 = vsel %vm921, %v1183, 0.0
        %v1200 = vsel %vm921, %v1184, 0.0
        %v1201 = vadd.f32 %v1199, %v1200
        %v1202 = vsel %vm921, %v1185, 0.0
        %v1203 = vadd.f32 %v1201, %v1202
        %v1204 = vsel %vm921, %v1186, 0.0
        %v1205 = vadd.f32 %v1203, %v1204
        %v1206 = vsel %vm921, %v1187, 0.0
        %v1207 = vadd.f32 %v1205, %v1206
        %v1208 = vsel %vm921, %v1188, 0.0
        %v1209 = vadd.f32 %v1207, %v1208
        %v1210 = vsel %vm921, %v1189, 0.0
        %v1211 = vadd.f32 %v1209, %v1210
        %v1212 = vsel %vm921, %v1190, 0.0
        %v1213 = vadd.f32 %v1211, %v1212
        %v1214 = vsel %vm921, %v1191, 0.0
        %v1215 = vadd.f32 %v1213, %v1214
        %v1216 = vsel %vm921, %v1192, 0.0
        %v1217 = vadd.f32 %v1215, %v1216
        %v1218 = vsel %vm921, %v1193, 0.0
        %v1219 = vadd.f32 %v1217, %v1218
        %v1220 = vsel %vm921, %v1194, 0.0
        %v1221 = vadd.f32 %v1219, %v1220
        %v1222 = vsel %vm921, %v1195, 0.0
        %v1223 = vadd.f32 %v1221, %v1222
        %v1224 = vsel %vm921, %v1196, 0.0
        %v1225 = vadd.f32 %v1223, %v1224
        %v1226 = vsel %vm921, %v1197, 0.0
        %v1227 = vadd.f32 %v1225, %v1226
        %v1228 = vsel %vm921, %v1198, 0.0
        %v1229 = vadd.f32 %v1227, %v1228
        %v1230 = vrot.slane %v1229, 4
        %v1231 = vadd.f32 %v1229, %v1230
        %v1232 = vrot.slane %v1231, 2
        %v1233 = vadd.f32 %v1231, %v1232
        %v1234 = vrot.slane %v1233, 1
        %v1235 = vadd.f32 %v1233, %v1234
        %vm1236 = vcmask 1040384
        %v1237 = vsel %vm1236, %v1182, %v1235
        %vm1238 = vcmask 58368
        %1239 = vst.msk [vmem:[%s265] sm:$0x3] %vm1238, %v1237
        %s1240 = smul.u32 8, %s24
        %p1241 = scmp.lt.s32.totalorder %s23, 1
        %s1242 = scalar_select %p1241, %s23, 1
        %p1243 = scmp.lt.s32.totalorder %s1240, 15
        %s1244 = scalar_select %p1243, %s1240, 15
        %s1245 = smul.addr %s1244, 2
        %s1246 = smul.addr %s1242, 32
        %s1247 = sadd.s32 %s1245, %s1246
        %s1248 = smul.addr %s1247, 8
        %s1249 = scalar_lea.vmem %s3, %s1248
        %s1250 = sand.u32 %s148, 1
        %s1251 = scalar_lea.sflag [#allocation3], %s1250
        %s1252 = sand.u32 %s148, 1
        %s1253 = smul.addr %s1252, 2
        %s1254 = scalar_lea.vmem [#allocation2], %s1253
        // Predicated region
        $region33: #{tpu_custom_call.1} parent=31 // pred_check
          %p1255 = pneg %p130
        $region34: #{tpu_custom_call.1} parent=31 // pred_check_branch
          %1257 = sbr.rel (%p1255) target = $region36
        $region35: #{tpu_custom_call.1} parent=31 // pred_region
          %s1258 = smul.u32 8, %s24
        $region36: #{tpu_custom_call.1} parent=31 // pred_fallthru
          _
        // Predicated region
        $region37: #{tpu_custom_call.1} parent=31 // pred_check
          %p1259 = pneg %p158
        $region38: #{tpu_custom_call.1} parent=31 // pred_check_branch
          %1261 = sbr.rel (%p1259) target = $region40
        $region39: #{tpu_custom_call.1} parent=31 // pred_region
          %1263 = vsyncadd %s1251, 0
          %s1264 = smul.addr %s23, 2
          %s1265 = sadd.s32 %s24, %s1264
          %s1266 = smul.addr %s1265, 2
          %s1267 = scalar_lea.hbm %s4, %s1266
          %s1269 = sshll.u32 %s1254, 4
          %s1270 = int_to_ptr.vmem [resolvable:$true] %s1269
          %s1271 = sshll.u32 %s1267, 4
          %s1272 = int_to_ptr.hbm [resolvable:$true] %s1271
          %1274 = dma.vmem_to_hbm [thread:$0]  %s1270, 32, %s1272, %s1251
        $region40: #{tpu_custom_call.1} parent=31 // pred_fallthru
          _
      $region32: #{tpu_custom_call.1} parent=5 // pred_fallthru
        _
      %p1275 = scmp.le.s32.totalorder 2, %s14
      // Predicated region
      $region41: #{tpu_custom_call.1} parent=5 // pred_check
        %p1276 = pneg %p1275
      $region42: #{tpu_custom_call.1} parent=5 // pred_check_branch
        %1278 = sbr.rel (%p1276) target = $region44
      $region43: #{tpu_custom_call.1} parent=5 // pred_region
        %s1279 = ssub.s32 %s14, 2
        // Predicated region
        $region45: #{tpu_custom_call.1} parent=43 // pred_check
          %p1280 = pneg %p136
        $region46: #{tpu_custom_call.1} parent=43 // pred_check_branch
          %1282 = sbr.rel (%p1280) target = $region48
        $region47: #{tpu_custom_call.1} parent=43 // pred_region
          %s1283 = smul.u32 8, %s26
          %p1284 = scmp.lt.s32.totalorder %s25, 1
          %s1285 = scalar_select %p1284, %s25, 1
          %p1286 = scmp.lt.s32.totalorder %s1283, 15
          %s1287 = scalar_select %p1286, %s1283, 15
          %s1288 = smul.addr %s1287, 2
          %s1289 = smul.addr %s1285, 32
          %s1290 = sadd.s32 %s1288, %s1289
          %s1291 = smul.addr %s1290, 8
          %s1292 = scalar_lea.vmem %s3, %s1291
        $region48: #{tpu_custom_call.1} parent=43 // pred_fallthru
          _
        // Predicated region
        $region49: #{tpu_custom_call.1} parent=43 // pred_check
          %p1293 = pneg %p164
        $region50: #{tpu_custom_call.1} parent=43 // pred_check_branch
          %1295 = sbr.rel (%p1293) target = $region52
        $region51: #{tpu_custom_call.1} parent=43 // pred_region
          %s1296 = sand.u32 %s149, 1
          %s1297 = scalar_lea.sflag [#allocation3], %s1296
          %s1298 = sand.u32 %s149, 1
          %s1299 = smul.addr %s1298, 2
          %s1300 = scalar_lea.vmem [#allocation2], %s1299
          %1302 = dma.done %s1297, 32
        $region52: #{tpu_custom_call.1} parent=43 // pred_fallthru
          _
      $region44: #{tpu_custom_call.1} parent=5 // pred_fallthru
        _
    $region6: #{tpu_custom_call.1} parent=1 // loop_footer
      %s18 = sadd.s32 1, %s14
    $region7: #{tpu_custom_call.1} parent=1 // loop_footer_branch
      %13 = sbr.rel target = $region3
    $region8: #{tpu_custom_call.1} parent=1 // loop_exit
      _
    %1303 = vsyncpa [#allocation3], 1
    %s1304 = scalar_lea.sflag [#allocation3], 1
    %1305 = vsyncpa %s1304, 1

</llo_original>
